<compile_context>
chip_gen: v7x
topology: tpu7x:2x2x1
jax: 0.10.0
libtpu: 0.0.40
codegen_flags: <defaults>
</compile_context>

<pallas_src>
import jax
import jax.numpy as jnp
from jax.experimental import pallas as pl
from jax.experimental.pallas import tpu as pltpu


def _make_kernel(embed_point_feats, has_feats, pc_dim, feat_dim):
    def kernel(freqs_ref, pc_ref, *rest):
        if has_feats:
            feats_ref, out_ref = rest
        else:
            (out_ref,) = rest

        freqs = freqs_ref[...]          # (1, F)
        pc = pc_ref[...]                # (tile, 3)

        def fourier(x, d):
            # d-major / f-minor ordering, matching the PyTorch FourierEmbedder:
            #   emb[:, i*F + f] = x[:, i] * freqs[f]
            cols = [x[:, i:i + 1] * freqs for i in range(d)]
            return cols[0] if d == 1 else jnp.concatenate(cols, axis=-1)

        emb = fourier(pc, pc_dim)                       # (tile, 3*F)
        pieces = [pc, jnp.sin(emb), jnp.cos(emb)]

        if has_feats:
            feats = feats_ref[...]                      # (tile, C)
            if embed_point_feats:
                femb = fourier(feats, feat_dim)
                pieces += [feats, jnp.sin(femb), jnp.cos(femb)]
            else:
                pieces += [feats]

        out_ref[...] = jnp.concatenate(pieces, axis=-1)

    return kernel


def perceiver_cross_attn_encoder_forward(
    pc,
    feats=None,
    *,
    num_freqs=6,
    include_pi=True,
    embed_point_feats=False,
    tile_n=2048,   # tuning knob: rows (B*N) per grid step, multiple of 8
):
    """Pallas implementation of PerceiverCrossAttentionEncoder.forward."""
    B, N, D = pc.shape
    assert D == 3, "pc must be [B, N, 3]"
    total = B * N

    # Frequencies, computed exactly as the reference FourierEmbedder does,
    # and passed to the kernel as a regular (VMEM) input.
    freqs = 2.0 ** jnp.arange(num_freqs, dtype=jnp.float32)
    if include_pi:
        freqs = freqs * jnp.pi
    freqs = freqs.reshape(1, num_freqs)

    pc2 = pc.reshape(total, D)
    has_feats = feats is not None
    if has_feats:
        C = feats.shape[-1]
        feats2 = feats.reshape(total, C)
        feat_out = C * (2 * num_freqs + 1) if embed_point_feats else C
    else:
        C = 0
        feats2 = None
        feat_out = 0
    out_dim = D * (2 * num_freqs + 1) + feat_out

    # Tile selection: if everything fits in one tile, use a full-extent block
    # (no 8-row alignment requirement). Otherwise use tile_n (multiple of 8);
    # the ragged final block is masked by Pallas automatically.
    if total <= tile_n:
        tile = total
    else:
        assert tile_n % 8 == 0, "tile_n must be a multiple of 8"
        tile = tile_n
    grid = (pl.cdiv(total, tile),)

    kernel = _make_kernel(embed_point_feats, has_feats, D, C)

    row_idx = lambda i: (i, 0)
    in_specs = [
        pl.BlockSpec((1, num_freqs), lambda i: (0, 0)),   # freqs (tiny, resident)
        pl.BlockSpec((tile, D), row_idx),                 # pc rows
    ]
    args = [freqs, pc2]
    if has_feats:
        in_specs.append(pl.BlockSpec((tile, C), row_idx))
        args.append(feats2)

    out2 = pl.pallas_call(
        kernel,
        out_shape=jax.ShapeDtypeStruct((total, out_dim), jnp.float32),
        grid_spec=pltpu.PrefetchScalarGridSpec(
            num_scalar_prefetch=0,
            grid=grid,
            in_specs=in_specs,
            out_specs=pl.BlockSpec((tile, out_dim), row_idx),
        ),
        compiler_params=pltpu.CompilerParams(
            dimension_semantics=("parallel",),
        ),
    )(*args)

    return out2.reshape(B, N, out_dim)


# ----------------------------- reference (plain JAX) -----------------------
def _ref_fourier(x, freqs):
    emb = (x[..., None] * freqs).reshape(*x.shape[:-1], -1)
    return jnp.concatenate([x, jnp.sin(emb), jnp.cos(emb)], axis=-1)


def _ref_forward(pc, feats, num_freqs, include_pi, embed_point_feats):
    freqs = 2.0 ** jnp.arange(num_freqs, dtype=jnp.float32)
    if include_pi:
        freqs = freqs * jnp.pi
    data = _ref_fourier(pc, freqs)
    if feats is not None:
        f = _ref_fourier(feats, freqs) if embed_point_feats else feats
        data = jnp.concatenate([data, f], axis=-1)
    return data


if __name__ == "__main__":
    key = jax.random.PRNGKey(0)
    k_pc, k_ft, k_pc2, k_ft2 = jax.random.split(key, 4)

    NUM_FREQS = 6
    EMBED_POINT_FEATS = False  # typical Michelangelo config

    # --- case 1: small problem, single full-extent block -------------------
    B, N, C = 2, 16, 4
    pc = jax.random.normal(k_pc, (B, N, 3), dtype=jnp.float32)
    feats = jax.random.normal(k_ft, (B, N, C), dtype=jnp.float32)

    out = perceiver_cross_attn_encoder_forward(
        pc, feats,
        num_freqs=NUM_FREQS, include_pi=True,
        embed_point_feats=EMBED_POINT_FEATS,
    )
    out = jax.block_until_ready(out)
    ref = _ref_forward(pc, feats, NUM_FREQS, True, EMBED_POINT_FEATS)
    assert out.shape == (B, N, 3 * (2 * NUM_FREQS + 1) + C), out.shape
    assert jnp.allclose(out, ref, atol=1e-5, rtol=1e-5), "mismatch (case 1)"

    # --- case 2: multi-step grid with a ragged final block -----------------
    B2, N2, C2 = 2, 18, 4     # total rows = 36, tile = 16 -> last block partial
    pc_b = jax.random.normal(k_pc2, (B2, N2, 3), dtype=jnp.float32)
    feats_b = jax.random.normal(k_ft2, (B2, N2, C2), dtype=jnp.float32)

    out_b = perceiver_cross_attn_encoder_forward(
        pc_b, feats_b,
        num_freqs=NUM_FREQS, include_pi=True,
        embed_point_feats=EMBED_POINT_FEATS,
        tile_n=16,
    )
    out_b = jax.block_until_ready(out_b)
    ref_b = _ref_forward(pc_b, feats_b, NUM_FREQS, True, EMBED_POINT_FEATS)
    assert jnp.allclose(out_b, ref_b, atol=1e-5, rtol=1e-5), "mismatch (case 2)"

    # --- case 3: feats=None path --------------------------------------------
    out_c = perceiver_cross_attn_encoder_forward(
        pc, None, num_freqs=NUM_FREQS, include_pi=True,
    )
    out_c = jax.block_until_ready(out_c)
    ref_c = _ref_forward(pc, None, NUM_FREQS, True, False)
    assert jnp.allclose(out_c, ref_c, atol=1e-5, rtol=1e-5), "mismatch (case 3)"

    # TODO(synk): the cross-attention / FPS downsample branch of the PyTorch
    # module is dead code (after `return data`) and is intentionally not
    # implemented.

    print("KERNEL_OK")
</pallas_src>

<mosaic_0001>
module attributes {stable_mosaic.version = 11 : i64} {
  func.func @kernel(%arg0: i32, %arg1: memref<1x6xf32, #tpu.memory_space<vmem>>, %arg2: memref<32x3xf32, #tpu.memory_space<vmem>>, %arg3: memref<32x4xf32, #tpu.memory_space<vmem>>, %arg4: memref<32x43xf32, #tpu.memory_space<vmem>>) attributes {dimension_semantics = [#tpu.dimension_semantics<parallel>], iteration_bounds = array<i64: 1>, scalar_prefetch = 0 : i64, scratch_operands = 0 : i64, tpu.core_type = #tpu.core_type<tc>, window_params = [{pipeline_mode = #tpu.pipeline_mode<synchronous>, transform_indices = @transform_0, window_bounds = array<i64: 1, 6>}, {transform_indices = @transform_1, window_bounds = array<i64: 32, 3>}, {transform_indices = @transform_2, window_bounds = array<i64: 32, 4>}, {transform_indices = @transform_3, window_bounds = array<i64: 32, 43>}]} {
    %c0 = arith.constant 0 : index
    %c0_0 = arith.constant 0 : index
    %0 = vector.load %arg1[%c0, %c0_0] : memref<1x6xf32, #tpu.memory_space<vmem>>, vector<1x6xf32>
    %c0_1 = arith.constant 0 : index
    %c0_2 = arith.constant 0 : index
    %1 = vector.load %arg2[%c0_1, %c0_2] : memref<32x3xf32, #tpu.memory_space<vmem>>, vector<32x3xf32>
    %2 = vector.extract_strided_slice %1 {offsets = [0, 0], sizes = [32, 1], strides = [1, 1]} : vector<32x3xf32> to vector<32x1xf32>
    %3 = vector.broadcast %2 : vector<32x1xf32> to vector<32x6xf32>
    %4 = vector.broadcast %0 : vector<1x6xf32> to vector<32x6xf32>
    %5 = arith.mulf %3, %4 : vector<32x6xf32>
    %6 = vector.extract_strided_slice %1 {offsets = [0, 1], sizes = [32, 1], strides = [1, 1]} : vector<32x3xf32> to vector<32x1xf32>
    %7 = vector.broadcast %6 : vector<32x1xf32> to vector<32x6xf32>
    %8 = vector.broadcast %0 : vector<1x6xf32> to vector<32x6xf32>
    %9 = arith.mulf %7, %8 : vector<32x6xf32>
    %10 = vector.extract_strided_slice %1 {offsets = [0, 2], sizes = [32, 1], strides = [1, 1]} : vector<32x3xf32> to vector<32x1xf32>
    %11 = vector.broadcast %10 : vector<32x1xf32> to vector<32x6xf32>
    %12 = vector.broadcast %0 : vector<1x6xf32> to vector<32x6xf32>
    %13 = arith.mulf %11, %12 : vector<32x6xf32>
    %14 = tpu.concatenate %5, %9, %13 in 1 : vector<32x6xf32>, vector<32x6xf32>, vector<32x6xf32> -> vector<32x18xf32>
    %15 = math.sin %14 : vector<32x18xf32>
    %16 = math.cos %14 : vector<32x18xf32>
    %c0_3 = arith.constant 0 : index
    %c0_4 = arith.constant 0 : index
    %17 = vector.load %arg3[%c0_3, %c0_4] : memref<32x4xf32, #tpu.memory_space<vmem>>, vector<32x4xf32>
    %18 = tpu.concatenate %1, %15, %16, %17 in 1 : vector<32x3xf32>, vector<32x18xf32>, vector<32x18xf32>, vector<32x4xf32> -> vector<32x43xf32>
    %c0_5 = arith.constant 0 : index
    %c0_6 = arith.constant 0 : index
    %19 = vector.load %arg4[%c0_5, %c0_6] : memref<32x43xf32, #tpu.memory_space<vmem>>, vector<32x43xf32>
    tpu.vector_store %arg4[%c0_5, %c0_6], %18 {strides = array<i32>} : memref<32x43xf32, #tpu.memory_space<vmem>>, vector<32x43xf32>,
    return
  }
  func.func @transform_0(%arg0: i32) -> (i32, i32) {
    %c0_i32 = arith.constant 0 : i32
    %c0_i32_0 = arith.constant 0 : i32
    %c0_i32_1 = arith.constant 0 : i32
    return %c0_i32, %c0_i32_0 : i32, i32
  }
  func.func @transform_1(%arg0: i32) -> (i32, i32) {
    %c0_i32 = arith.constant 0 : i32
    %c0_i32_0 = arith.constant 0 : i32
    return %arg0, %c0_i32 : i32, i32
  }
  func.func @transform_2(%arg0: i32) -> (i32, i32) {
    %c0_i32 = arith.constant 0 : i32
    %c0_i32_0 = arith.constant 0 : i32
    return %arg0, %c0_i32 : i32, i32
  }
  func.func @transform_3(%arg0: i32) -> (i32, i32) {
    %c0_i32 = arith.constant 0 : i32
    %c0_i32_0 = arith.constant 0 : i32
    return %arg0, %c0_i32 : i32, i32
  }
}

</mosaic_0001>

<llo_original>
// kernel: tpu_custom_call.1
$region0: #{tpu_custom_call.1}
  #allocation0 [shape = 'u32[]', space=smem, size = 0x4, offset = 0x4, fixed_abs, tag = 'smem constant byte address 0x4 - core index']
  #allocation1 [shape = 'u32[144,128]{1,0:T(1,128)}', space=vmem, size = 0x12000, scoped, tag = 'internal scratch']
  %s0 = inlined_call_operand.vmem [shape: f32[1,6], index: 0, kind: input, shape index: {}]
  %s1 = inlined_call_operand.vmem [shape: f32[32,3], index: 1, kind: input, shape index: {}]
  %s2 = inlined_call_operand.vmem [shape: f32[32,4], index: 2, kind: input, shape index: {}]
  %s3 = inlined_call_operand.hbm [shape: f32[32,43], index: 3, kind: output, shape index: {}]
  %s4 = sld [smem:[#allocation0]]
  $region22: #{tpu_custom_call.1} parent=0
    _
  %s6 = ssub.s32 1, %s4
  %s7 = scalar_select 0, %s6, %s4
  $region1: #{tpu_custom_call.1} parent=0
    #allocation2 [shape = 'u8[16384]{0}', space=vmem, size = 0x4000, scoped, tag = 'output window, operand 0, single buffered']
    #allocation3 [shape = 's32[1]{0}', space=sflag, size = 0x4, scoped, tag = 'scoped memory for tpu_custom_call.1']
    %8 = vsyncpa [#allocation3], 0
    // Predicated region
    $region2: #{tpu_custom_call.1} parent=1 // pred_check
      _
    $region3: #{tpu_custom_call.1} parent=1 // pred_check_branch
      %10 = sbr.rel (0) target = $region5
    $region4: #{tpu_custom_call.1} parent=1 // pred_region
      _
    $region5: #{tpu_custom_call.1} parent=1 // pred_fallthru
      _
    // Predicated region
    $region6: #{tpu_custom_call.1} parent=1 // pred_check
      _
    $region7: #{tpu_custom_call.1} parent=1 // pred_check_branch
      %12 = sbr.rel (0) target = $region9
    $region8: #{tpu_custom_call.1} parent=1 // pred_region
      _
    $region9: #{tpu_custom_call.1} parent=1 // pred_fallthru
      _
    // Predicated region
    $region10: #{tpu_custom_call.1} parent=1 // pred_check
      _
    $region11: #{tpu_custom_call.1} parent=1 // pred_check_branch
      %14 = sbr.rel (0) target = $region13
    $region12: #{tpu_custom_call.1} parent=1 // pred_region
      _
    $region13: #{tpu_custom_call.1} parent=1 // pred_fallthru
      _
    %v15 = vld [vmem:[%s0] sm:$0x1]
    %v16 = vld [vmem:[%s1] sm:$0xff]
    %v17 = vld [vmem:[%s1 + $0x8] sm:$0xff]
    %v18 = vld [vmem:[%s1 + $0x10] sm:$0xff]
    %v19 = vld [vmem:[%s1 + $0x18] sm:$0xff]
    %21 = vset.pattern.permute.xlu0 0
    %22 = vperm.xlu0 %21, %v16
    %v23 = vpop.permute.xlu0 %22
    %26 = vset.pattern.permute.xlu0 0
    %27 = vperm.xlu0 %26, %v17
    %v28 = vpop.permute.xlu0 %27
    %31 = vset.pattern.permute.xlu0 0
    %32 = vperm.xlu0 %31, %v18
    %v33 = vpop.permute.xlu0 %32
    %36 = vset.pattern.permute.xlu0 0
    %37 = vperm.xlu0 %36, %v19
    %v38 = vpop.permute.xlu0 %37
    %v41 = vlaneseq
    %v42 = vshrl.u32 %v41, 7
    %v43 = vsub.s32 0, %v42
    %v44 = vrot.slane %v15, %v43
    %v46 = vmul.f32 %v23, %v44
    %v47 = vmul.f32 %v28, %v44
    %v48 = vmul.f32 %v33, %v44
    %v49 = vmul.f32 %v38, %v44
    %50 = vset.pattern.permute.xlu0 1
    %51 = vperm.xlu0 %50, %v16
    %v52 = vpop.permute.xlu0 %51
    %54 = vset.pattern.permute.xlu0 1
    %55 = vperm.xlu0 %54, %v17
    %v56 = vpop.permute.xlu0 %55
    %58 = vset.pattern.permute.xlu0 1
    %59 = vperm.xlu0 %58, %v18
    %v60 = vpop.permute.xlu0 %59
    %62 = vset.pattern.permute.xlu0 1
    %63 = vperm.xlu0 %62, %v19
    %v64 = vpop.permute.xlu0 %63
    %v66 = vmul.f32 %v52, %v44
    %v67 = vmul.f32 %v56, %v44
    %v68 = vmul.f32 %v60, %v44
    %v69 = vmul.f32 %v64, %v44
    %70 = vset.pattern.permute.xlu0 2
    %71 = vperm.xlu0 %70, %v16
    %v72 = vpop.permute.xlu0 %71
    %74 = vset.pattern.permute.xlu0 2
    %75 = vperm.xlu0 %74, %v17
    %v76 = vpop.permute.xlu0 %75
    %78 = vset.pattern.permute.xlu0 2
    %79 = vperm.xlu0 %78, %v18
    %v80 = vpop.permute.xlu0 %79
    %82 = vset.pattern.permute.xlu0 2
    %83 = vperm.xlu0 %82, %v19
    %v84 = vpop.permute.xlu0 %83
    %v86 = vmul.f32 %v72, %v44
    %v87 = vmul.f32 %v76, %v44
    %v88 = vmul.f32 %v80, %v44
    %v89 = vmul.f32 %v84, %v44
    %94 = vrot.lane.b32.xlu0 %v66, 6
    %v95 = vpop.permute.xlu0 %94
    %96 = vrot.lane.b32.xlu0 %v67, 6
    %v97 = vpop.permute.xlu0 %96
    %98 = vrot.lane.b32.xlu0 %v68, 6
    %v99 = vpop.permute.xlu0 %98
    %100 = vrot.lane.b32.xlu0 %v69, 6
    %v101 = vpop.permute.xlu0 %100
    %110 = vrot.lane.b32.xlu0 %v86, 12
    %v111 = vpop.permute.xlu0 %110
    %112 = vrot.lane.b32.xlu0 %v87, 12
    %v113 = vpop.permute.xlu0 %112
    %114 = vrot.lane.b32.xlu0 %v88, 12
    %v115 = vpop.permute.xlu0 %114
    %116 = vrot.lane.b32.xlu0 %v89, 12
    %v117 = vpop.permute.xlu0 %116
    %vm122 = vcmask 48128
    %v123 = vsel %vm122, %v46, %v95
    %v124 = vsel %vm122, %v47, %v97
    %v125 = vsel %vm122, %v48, %v99
    %v126 = vsel %vm122, %v49, %v101
    %vm127 = vcmask 97280
    %v128 = vsel %vm127, %v123, %v111
    %v129 = vsel %vm127, %v124, %v113
    %v130 = vsel %vm127, %v125, %v115
    %v131 = vsel %vm127, %v126, %v117
    %v132 = vand.u32 2147483647, %v128
    %vm133 = vcmp.le.f32.partialorder %v132, 0.7853982
    %vm134 = vcmp.lt.s32.totalorder %v128, 0
    %v135 = vand.u32 %v128, 2139095040
    %v136 = vshrl.u32 %v135, 23
    %v137 = vsub.s32 %v136, 127
    %v138 = vand.u32 2147483647, %v128
    %v139 = vand.u32 %v138, 8388607
    %v140 = vor.u32 %v139, 8388608
    %v141 = vsub.s32 0, %v140
    %v142 = vadd.s32 %v137, 1
    %vm143 = vcmp.gt.s32.totalorder %v142, 0
    %v144 = vsel %vm143, %v142, 0
    %v145 = vshrl.u32 %v144, 5
    %v146 = vand.u32 %v144, 31
    %v147 = vsub.s32 32, %v146
    %v148 = vshrl.u32 683565275, %v147
    %v149 = vshll.u32 683565275, %v146
    %v150 = vshrl.u32 2475754826, %v147
    %v151 = vor.u32 %v149, %v150
    %v152 = vshll.u32 2475754826, %v146
    %v153 = vshrl.u32 2131351028, %v147
    %v154 = vor.u32 %v152, %v153
    %v155 = vshll.u32 2131351028, %v146
    %v156 = vshrl.u32 2102212464, %v147
    %v157 = vor.u32 %v155, %v156
    %v158 = vshll.u32 2102212464, %v146
    %v159 = vshrl.u32 920167782, %v147
    %v160 = vor.u32 %v158, %v159
    %v161 = vshll.u32 920167782, %v146
    %v162 = vshrl.u32 1326507024, %v147
    %v163 = vor.u32 %v161, %v162
    %vm164 = vcmp.lt.s32.totalorder %v145, 1
    %vm165 = vcmp.lt.s32.totalorder %v145, 2
    %vm166 = vcmp.lt.s32.totalorder %v145, 3
    %vm167 = vcmp.lt.s32.totalorder %v145, 4
    %v168 = vsel %vm164, %v148, %v151
    %v169 = vsel %vm167, %v157, 2102212464
    %v170 = vsel %vm166, %v154, %v169
    %v171 = vsel %vm165, %v168, %v170
    %v172 = vsel %vm164, %v151, %v154
    %v173 = vsel %vm167, %v160, 920167782
    %v174 = vsel %vm166, %v157, %v173
    %v175 = vsel %vm165, %v172, %v174
    %v176 = vsel %vm164, %v154, %v157
    %v177 = vsel %vm167, %v163, 1326507024
    %v178 = vsel %vm166, %v160, %v177
    %v179 = vsel %vm165, %v176, %v178
    %v180 = vshll.u32 %v140, 8
    %v181 = vmul.u32.u64.compose %v180, %v179
    %v182 = vextract.low.u32 %v181
    %v183 = vextract.high.u32 %v181
    %v184 = vmul.u32.u64.compose %v180, %v175
    %v185 = vextract.low.u32 %v184
    %v186 = vextract.high.u32 %v184
    %v187 = vmul.u32 %v180, %v171
    %v188 = vadd.s32 %v183, %v185
    %vm189 = vc.u32 %v183, %v185
    %v190 = vadd.s32 %v186, 1
    %v191 = vsel %vm189, %v190, %v186
    %v192 = vadd.s32 %v187, %v191
    %v193 = vadd.s32 %v192, 536870912
    %v194 = vshrl.u32 %v193, 30
    %v195 = vshll.u32 %v194, 30
    %v196 = vsub.s32 %v192, %v195
    %vm197 = vcmp.lt.s32.totalorder %v196, 0
    %v198 = vsub.s32 0, %v196
    %v199 = vsel %vm197, %v198, %v196
    %v200 = vclz %v199
    %v201 = vsub.s32 %v200, 2
    %vm202 = vcmp.gt.s32.totalorder 0, %v201
    %v203 = vsel %vm202, 0, %v201
    %v204 = vsub.s32 32, %v203
    %v205 = vshll.u32 %v196, %v203
    %v206 = vshrl.u32 %v188, %v204
    %v207 = vor.u32 %v205, %v206
    %v208 = vsub.s32 4294967266, %v203
    %v209 = vadd.s32 %v208, 127
    %v210 = vshll.u32 %v209, 23
    %v211 = vor.u32 4788187, %v210
    %v212 = vand.u32 2147483647, %v211
    %v214 = vcvt.s32.f32 %v207
    %v215 = vmul.f32 %v214, %v212
    %v216 = vxor.u32 %v215, 2147483648
    %v217 = vsel %vm134, %v216, %v215
    %v218 = vsub.s32 4, %v194
    %v219 = vsel %vm134, %v218, %v194
    %v220 = vsel %vm133, %v128, %v217
    %v221 = vsel %vm133, 0, %v219
    %v222 = vcosq.f32.pop %v220
    %v223 = vsinq.f32.pop %v220
    %vm224 = vweird.f32 %v128
    %v225 = vadd.s32 %v221, 3
    %v226 = vand.u32 %v225, 3
    %vm227 = vcmp.lt.s32.totalorder %v226, 2
    %vm228 = vcmp.eq.s32.totalorder %v226, 0
    %v229 = vxor.u32 %v223, 2147483648
    %v230 = vsel %vm228, %v222, %v229
    %vm231 = vcmp.eq.s32.totalorder %v226, 2
    %v232 = vxor.u32 %v222, 2147483648
    %v233 = vsel %vm231, %v232, %v223
    %v234 = vsel %vm227, %v230, %v233
    %v235 = vsel %vm224, nan, %v234
    %v236 = vand.u32 2147483647, %v129
    %vm237 = vcmp.le.f32.partialorder %v236, 0.7853982
    %vm238 = vcmp.lt.s32.totalorder %v129, 0
    %v239 = vand.u32 %v129, 2139095040
    %v240 = vshrl.u32 %v239, 23
    %v241 = vsub.s32 %v240, 127
    %v242 = vand.u32 2147483647, %v129
    %v243 = vand.u32 %v242, 8388607
    %v244 = vor.u32 %v243, 8388608
    %v245 = vsub.s32 0, %v244
    %v246 = vadd.s32 %v241, 1
    %vm247 = vcmp.gt.s32.totalorder %v246, 0
    %v248 = vsel %vm247, %v246, 0
    %v249 = vshrl.u32 %v248, 5
    %v250 = vand.u32 %v248, 31
    %v251 = vsub.s32 32, %v250
    %v252 = vshrl.u32 683565275, %v251
    %v253 = vshll.u32 683565275, %v250
    %v254 = vshrl.u32 2475754826, %v251
    %v255 = vor.u32 %v253, %v254
    %v256 = vshll.u32 2475754826, %v250
    %v257 = vshrl.u32 2131351028, %v251
    %v258 = vor.u32 %v256, %v257
    %v259 = vshll.u32 2131351028, %v250
    %v260 = vshrl.u32 2102212464, %v251
    %v261 = vor.u32 %v259, %v260
    %v262 = vshll.u32 2102212464, %v250
    %v263 = vshrl.u32 920167782, %v251
    %v264 = vor.u32 %v262, %v263
    %v265 = vshll.u32 920167782, %v250
    %v266 = vshrl.u32 1326507024, %v251
    %v267 = vor.u32 %v265, %v266
    %vm268 = vcmp.lt.s32.totalorder %v249, 1
    %vm269 = vcmp.lt.s32.totalorder %v249, 2
    %vm270 = vcmp.lt.s32.totalorder %v249, 3
    %vm271 = vcmp.lt.s32.totalorder %v249, 4
    %v272 = vsel %vm268, %v252, %v255
    %v273 = vsel %vm271, %v261, 2102212464
    %v274 = vsel %vm270, %v258, %v273
    %v275 = vsel %vm269, %v272, %v274
    %v276 = vsel %vm268, %v255, %v258
    %v277 = vsel %vm271, %v264, 920167782
    %v278 = vsel %vm270, %v261, %v277
    %v279 = vsel %vm269, %v276, %v278
    %v280 = vsel %vm268, %v258, %v261
    %v281 = vsel %vm271, %v267, 1326507024
    %v282 = vsel %vm270, %v264, %v281
    %v283 = vsel %vm269, %v280, %v282
    %v284 = vshll.u32 %v244, 8
    %v285 = vmul.u32.u64.compose %v284, %v283
    %v286 = vextract.low.u32 %v285
    %v287 = vextract.high.u32 %v285
    %v288 = vmul.u32.u64.compose %v284, %v279
    %v289 = vextract.low.u32 %v288
    %v290 = vextract.high.u32 %v288
    %v291 = vmul.u32 %v284, %v275
    %v292 = vadd.s32 %v287, %v289
    %vm293 = vc.u32 %v287, %v289
    %v294 = vadd.s32 %v290, 1
    %v295 = vsel %vm293, %v294, %v290
    %v296 = vadd.s32 %v291, %v295
    %v297 = vadd.s32 %v296, 536870912
    %v298 = vshrl.u32 %v297, 30
    %v299 = vshll.u32 %v298, 30
    %v300 = vsub.s32 %v296, %v299
    %vm301 = vcmp.lt.s32.totalorder %v300, 0
    %v302 = vsub.s32 0, %v300
    %v303 = vsel %vm301, %v302, %v300
    %v304 = vclz %v303
    %v305 = vsub.s32 %v304, 2
    %vm306 = vcmp.gt.s32.totalorder 0, %v305
    %v307 = vsel %vm306, 0, %v305
    %v308 = vsub.s32 32, %v307
    %v309 = vshll.u32 %v300, %v307
    %v310 = vshrl.u32 %v292, %v308
    %v311 = vor.u32 %v309, %v310
    %v312 = vsub.s32 4294967266, %v307
    %v313 = vadd.s32 %v312, 127
    %v314 = vshll.u32 %v313, 23
    %v315 = vor.u32 4788187, %v314
    %v316 = vand.u32 2147483647, %v315
    %v318 = vcvt.s32.f32 %v311
    %v319 = vmul.f32 %v318, %v316
    %v320 = vxor.u32 %v319, 2147483648
    %v321 = vsel %vm238, %v320, %v319
    %v322 = vsub.s32 4, %v298
    %v323 = vsel %vm238, %v322, %v298
    %v324 = vsel %vm237, %v129, %v321
    %v325 = vsel %vm237, 0, %v323
    %v326 = vcosq.f32.pop %v324
    %v327 = vsinq.f32.pop %v324
    %vm328 = vweird.f32 %v129
    %v329 = vadd.s32 %v325, 3
    %v330 = vand.u32 %v329, 3
    %vm331 = vcmp.lt.s32.totalorder %v330, 2
    %vm332 = vcmp.eq.s32.totalorder %v330, 0
    %v333 = vxor.u32 %v327, 2147483648
    %v334 = vsel %vm332, %v326, %v333
    %vm335 = vcmp.eq.s32.totalorder %v330, 2
    %v336 = vxor.u32 %v326, 2147483648
    %v337 = vsel %vm335, %v336, %v327
    %v338 = vsel %vm331, %v334, %v337
    %v339 = vsel %vm328, nan, %v338
    %v340 = vand.u32 2147483647, %v130
    %vm341 = vcmp.le.f32.partialorder %v340, 0.7853982
    %vm342 = vcmp.lt.s32.totalorder %v130, 0
    %v343 = vand.u32 %v130, 2139095040
    %v344 = vshrl.u32 %v343, 23
    %v345 = vsub.s32 %v344, 127
    %v346 = vand.u32 2147483647, %v130
    %v347 = vand.u32 %v346, 8388607
    %v348 = vor.u32 %v347, 8388608
    %v349 = vsub.s32 0, %v348
    %v350 = vadd.s32 %v345, 1
    %vm351 = vcmp.gt.s32.totalorder %v350, 0
    %v352 = vsel %vm351, %v350, 0
    %v353 = vshrl.u32 %v352, 5
    %v354 = vand.u32 %v352, 31
    %v355 = vsub.s32 32, %v354
    %v356 = vshrl.u32 683565275, %v355
    %v357 = vshll.u32 683565275, %v354
    %v358 = vshrl.u32 2475754826, %v355
    %v359 = vor.u32 %v357, %v358
    %v360 = vshll.u32 2475754826, %v354
    %v361 = vshrl.u32 2131351028, %v355
    %v362 = vor.u32 %v360, %v361
    %v363 = vshll.u32 2131351028, %v354
    %v364 = vshrl.u32 2102212464, %v355
    %v365 = vor.u32 %v363, %v364
    %v366 = vshll.u32 2102212464, %v354
    %v367 = vshrl.u32 920167782, %v355
    %v368 = vor.u32 %v366, %v367
    %v369 = vshll.u32 920167782, %v354
    %v370 = vshrl.u32 1326507024, %v355
    %v371 = vor.u32 %v369, %v370
    %vm372 = vcmp.lt.s32.totalorder %v353, 1
    %vm373 = vcmp.lt.s32.totalorder %v353, 2
    %vm374 = vcmp.lt.s32.totalorder %v353, 3
    %vm375 = vcmp.lt.s32.totalorder %v353, 4
    %v376 = vsel %vm372, %v356, %v359
    %v377 = vsel %vm375, %v365, 2102212464
    %v378 = vsel %vm374, %v362, %v377
    %v379 = vsel %vm373, %v376, %v378
    %v380 = vsel %vm372, %v359, %v362
    %v381 = vsel %vm375, %v368, 920167782
    %v382 = vsel %vm374, %v365, %v381
    %v383 = vsel %vm373, %v380, %v382
    %v384 = vsel %vm372, %v362, %v365
    %v385 = vsel %vm375, %v371, 1326507024
    %v386 = vsel %vm374, %v368, %v385
    %v387 = vsel %vm373, %v384, %v386
    %v388 = vshll.u32 %v348, 8
    %v389 = vmul.u32.u64.compose %v388, %v387
    %v390 = vextract.low.u32 %v389
    %v391 = vextract.high.u32 %v389
    %v392 = vmul.u32.u64.compose %v388, %v383
    %v393 = vextract.low.u32 %v392
    %v394 = vextract.high.u32 %v392
    %v395 = vmul.u32 %v388, %v379
    %v396 = vadd.s32 %v391, %v393
    %vm397 = vc.u32 %v391, %v393
    %v398 = vadd.s32 %v394, 1
    %v399 = vsel %vm397, %v398, %v394
    %v400 = vadd.s32 %v395, %v399
    %v401 = vadd.s32 %v400, 536870912
    %v402 = vshrl.u32 %v401, 30
    %v403 = vshll.u32 %v402, 30
    %v404 = vsub.s32 %v400, %v403
    %vm405 = vcmp.lt.s32.totalorder %v404, 0
    %v406 = vsub.s32 0, %v404
    %v407 = vsel %vm405, %v406, %v404
    %v408 = vclz %v407
    %v409 = vsub.s32 %v408, 2
    %vm410 = vcmp.gt.s32.totalorder 0, %v409
    %v411 = vsel %vm410, 0, %v409
    %v412 = vsub.s32 32, %v411
    %v413 = vshll.u32 %v404, %v411
    %v414 = vshrl.u32 %v396, %v412
    %v415 = vor.u32 %v413, %v414
    %v416 = vsub.s32 4294967266, %v411
    %v417 = vadd.s32 %v416, 127
    %v418 = vshll.u32 %v417, 23
    %v419 = vor.u32 4788187, %v418
    %v420 = vand.u32 2147483647, %v419
    %v422 = vcvt.s32.f32 %v415
    %v423 = vmul.f32 %v422, %v420
    %v424 = vxor.u32 %v423, 2147483648
    %v425 = vsel %vm342, %v424, %v423
    %v426 = vsub.s32 4, %v402
    %v427 = vsel %vm342, %v426, %v402
    %v428 = vsel %vm341, %v130, %v425
    %v429 = vsel %vm341, 0, %v427
    %v430 = vcosq.f32.pop %v428
    %v431 = vsinq.f32.pop %v428
    %vm432 = vweird.f32 %v130
    %v433 = vadd.s32 %v429, 3
    %v434 = vand.u32 %v433, 3
    %vm435 = vcmp.lt.s32.totalorder %v434, 2
    %vm436 = vcmp.eq.s32.totalorder %v434, 0
    %v437 = vxor.u32 %v431, 2147483648
    %v438 = vsel %vm436, %v430, %v437
    %vm439 = vcmp.eq.s32.totalorder %v434, 2
    %v440 = vxor.u32 %v430, 2147483648
    %v441 = vsel %vm439, %v440, %v431
    %v442 = vsel %vm435, %v438, %v441
    %v443 = vsel %vm432, nan, %v442
    %v444 = vand.u32 2147483647, %v131
    %vm445 = vcmp.le.f32.partialorder %v444, 0.7853982
    %vm446 = vcmp.lt.s32.totalorder %v131, 0
    %v447 = vand.u32 %v131, 2139095040
    %v448 = vshrl.u32 %v447, 23
    %v449 = vsub.s32 %v448, 127
    %v450 = vand.u32 2147483647, %v131
    %v451 = vand.u32 %v450, 8388607
    %v452 = vor.u32 %v451, 8388608
    %v453 = vsub.s32 0, %v452
    %v454 = vadd.s32 %v449, 1
    %vm455 = vcmp.gt.s32.totalorder %v454, 0
    %v456 = vsel %vm455, %v454, 0
    %v457 = vshrl.u32 %v456, 5
    %v458 = vand.u32 %v456, 31
    %v459 = vsub.s32 32, %v458
    %v460 = vshrl.u32 683565275, %v459
    %v461 = vshll.u32 683565275, %v458
    %v462 = vshrl.u32 2475754826, %v459
    %v463 = vor.u32 %v461, %v462
    %v464 = vshll.u32 2475754826, %v458
    %v465 = vshrl.u32 2131351028, %v459
    %v466 = vor.u32 %v464, %v465
    %v467 = vshll.u32 2131351028, %v458
    %v468 = vshrl.u32 2102212464, %v459
    %v469 = vor.u32 %v467, %v468
    %v470 = vshll.u32 2102212464, %v458
    %v471 = vshrl.u32 920167782, %v459
    %v472 = vor.u32 %v470, %v471
    %v473 = vshll.u32 920167782, %v458
    %v474 = vshrl.u32 1326507024, %v459
    %v475 = vor.u32 %v473, %v474
    %vm476 = vcmp.lt.s32.totalorder %v457, 1
    %vm477 = vcmp.lt.s32.totalorder %v457, 2
    %vm478 = vcmp.lt.s32.totalorder %v457, 3
    %vm479 = vcmp.lt.s32.totalorder %v457, 4
    %v480 = vsel %vm476, %v460, %v463
    %v481 = vsel %vm479, %v469, 2102212464
    %v482 = vsel %vm478, %v466, %v481
    %v483 = vsel %vm477, %v480, %v482
    %v484 = vsel %vm476, %v463, %v466
    %v485 = vsel %vm479, %v472, 920167782
    %v486 = vsel %vm478, %v469, %v485
    %v487 = vsel %vm477, %v484, %v486
    %v488 = vsel %vm476, %v466, %v469
    %v489 = vsel %vm479, %v475, 1326507024
    %v490 = vsel %vm478, %v472, %v489
    %v491 = vsel %vm477, %v488, %v490
    %v492 = vshll.u32 %v452, 8
    %v493 = vmul.u32.u64.compose %v492, %v491
    %v494 = vextract.low.u32 %v493
    %v495 = vextract.high.u32 %v493
    %v496 = vmul.u32.u64.compose %v492, %v487
    %v497 = vextract.low.u32 %v496
    %v498 = vextract.high.u32 %v496
    %v499 = vmul.u32 %v492, %v483
    %v500 = vadd.s32 %v495, %v497
    %vm501 = vc.u32 %v495, %v497
    %v502 = vadd.s32 %v498, 1
    %v503 = vsel %vm501, %v502, %v498
    %v504 = vadd.s32 %v499, %v503
    %v505 = vadd.s32 %v504, 536870912
    %v506 = vshrl.u32 %v505, 30
    %v507 = vshll.u32 %v506, 30
    %v508 = vsub.s32 %v504, %v507
    %vm509 = vcmp.lt.s32.totalorder %v508, 0
    %v510 = vsub.s32 0, %v508
    %v511 = vsel %vm509, %v510, %v508
    %v512 = vclz %v511
    %v513 = vsub.s32 %v512, 2
    %vm514 = vcmp.gt.s32.totalorder 0, %v513
    %v515 = vsel %vm514, 0, %v513
    %v516 = vsub.s32 32, %v515
    %v517 = vshll.u32 %v508, %v515
    %v518 = vshrl.u32 %v500, %v516
    %v519 = vor.u32 %v517, %v518
    %v520 = vsub.s32 4294967266, %v515
    %v521 = vadd.s32 %v520, 127
    %v522 = vshll.u32 %v521, 23
    %v523 = vor.u32 4788187, %v522
    %v524 = vand.u32 2147483647, %v523
    %v526 = vcvt.s32.f32 %v519
    %v527 = vmul.f32 %v526, %v524
    %v528 = vxor.u32 %v527, 2147483648
    %v529 = vsel %vm446, %v528, %v527
    %v530 = vsub.s32 4, %v506
    %v531 = vsel %vm446, %v530, %v506
    %v532 = vsel %vm445, %v131, %v529
    %v533 = vsel %vm445, 0, %v531
    %v534 = vcosq.f32.pop %v532
    %v535 = vsinq.f32.pop %v532
    %vm536 = vweird.f32 %v131
    %v537 = vadd.s32 %v533, 3
    %v538 = vand.u32 %v537, 3
    %vm539 = vcmp.lt.s32.totalorder %v538, 2
    %vm540 = vcmp.eq.s32.totalorder %v538, 0
    %v541 = vxor.u32 %v535, 2147483648
    %v542 = vsel %vm540, %v534, %v541
    %vm543 = vcmp.eq.s32.totalorder %v538, 2
    %v544 = vxor.u32 %v534, 2147483648
    %v545 = vsel %vm543, %v544, %v535
    %v546 = vsel %vm539, %v542, %v545
    %v547 = vsel %vm536, nan, %v546
    %v548 = vand.u32 2147483647, %v128
    %vm549 = vcmp.le.f32.partialorder %v548, 0.7853982
    %vm550 = vcmp.lt.s32.totalorder %v128, 0
    %v551 = vand.u32 %v128, 2139095040
    %v552 = vshrl.u32 %v551, 23
    %v553 = vsub.s32 %v552, 127
    %v554 = vand.u32 2147483647, %v128
    %v555 = vand.u32 %v554, 8388607
    %v556 = vor.u32 %v555, 8388608
    %v557 = vsub.s32 0, %v556
    %v558 = vadd.s32 %v553, 1
    %vm559 = vcmp.gt.s32.totalorder %v558, 0
    %v560 = vsel %vm559, %v558, 0
    %v561 = vshrl.u32 %v560, 5
    %v562 = vand.u32 %v560, 31
    %v563 = vsub.s32 32, %v562
    %v564 = vshrl.u32 683565275, %v563
    %v565 = vshll.u32 683565275, %v562
    %v566 = vshrl.u32 2475754826, %v563
    %v567 = vor.u32 %v565, %v566
    %v568 = vshll.u32 2475754826, %v562
    %v569 = vshrl.u32 2131351028, %v563
    %v570 = vor.u32 %v568, %v569
    %v571 = vshll.u32 2131351028, %v562
    %v572 = vshrl.u32 2102212464, %v563
    %v573 = vor.u32 %v571, %v572
    %v574 = vshll.u32 2102212464, %v562
    %v575 = vshrl.u32 920167782, %v563
    %v576 = vor.u32 %v574, %v575
    %v577 = vshll.u32 920167782, %v562
    %v578 = vshrl.u32 1326507024, %v563
    %v579 = vor.u32 %v577, %v578
    %vm580 = vcmp.lt.s32.totalorder %v561, 1
    %vm581 = vcmp.lt.s32.totalorder %v561, 2
    %vm582 = vcmp.lt.s32.totalorder %v561, 3
    %vm583 = vcmp.lt.s32.totalorder %v561, 4
    %v584 = vsel %vm580, %v564, %v567
    %v585 = vsel %vm583, %v573, 2102212464
    %v586 = vsel %vm582, %v570, %v585
    %v587 = vsel %vm581, %v584, %v586
    %v588 = vsel %vm580, %v567, %v570
    %v589 = vsel %vm583, %v576, 920167782
    %v590 = vsel %vm582, %v573, %v589
    %v591 = vsel %vm581, %v588, %v590
    %v592 = vsel %vm580, %v570, %v573
    %v593 = vsel %vm583, %v579, 1326507024
    %v594 = vsel %vm582, %v576, %v593
    %v595 = vsel %vm581, %v592, %v594
    %v596 = vshll.u32 %v556, 8
    %v597 = vmul.u32.u64.compose %v596, %v595
    %v598 = vextract.low.u32 %v597
    %v599 = vextract.high.u32 %v597
    %v600 = vmul.u32.u64.compose %v596, %v591
    %v601 = vextract.low.u32 %v600
    %v602 = vextract.high.u32 %v600
    %v603 = vmul.u32 %v596, %v587
    %v604 = vadd.s32 %v599, %v601
    %vm605 = vc.u32 %v599, %v601
    %v606 = vadd.s32 %v602, 1
    %v607 = vsel %vm605, %v606, %v602
    %v608 = vadd.s32 %v603, %v607
    %v609 = vadd.s32 %v608, 536870912
    %v610 = vshrl.u32 %v609, 30
    %v611 = vshll.u32 %v610, 30
    %v612 = vsub.s32 %v608, %v611
    %vm613 = vcmp.lt.s32.totalorder %v612, 0
    %v614 = vsub.s32 0, %v612
    %v615 = vsel %vm613, %v614, %v612
    %v616 = vclz %v615
    %v617 = vsub.s32 %v616, 2
    %vm618 = vcmp.gt.s32.totalorder 0, %v617
    %v619 = vsel %vm618, 0, %v617
    %v620 = vsub.s32 32, %v619
    %v621 = vshll.u32 %v612, %v619
    %v622 = vshrl.u32 %v604, %v620
    %v623 = vor.u32 %v621, %v622
    %v624 = vsub.s32 4294967266, %v619
    %v625 = vadd.s32 %v624, 127
    %v626 = vshll.u32 %v625, 23
    %v627 = vor.u32 4788187, %v626
    %v628 = vand.u32 2147483647, %v627
    %v630 = vcvt.s32.f32 %v623
    %v631 = vmul.f32 %v630, %v628
    %v632 = vxor.u32 %v631, 2147483648
    %v633 = vsel %vm550, %v632, %v631
    %v634 = vsub.s32 4, %v610
    %v635 = vsel %vm550, %v634, %v610
    %v636 = vsel %vm549, %v128, %v633
    %v637 = vsel %vm549, 0, %v635
    %v638 = vcosq.f32.pop %v636
    %v639 = vsinq.f32.pop %v636
    %vm640 = vweird.f32 %v128
    %v641 = vand.u32 %v637, 3
    %vm642 = vcmp.lt.s32.totalorder %v641, 2
    %vm643 = vcmp.eq.s32.totalorder %v641, 0
    %v644 = vxor.u32 %v639, 2147483648
    %v645 = vsel %vm643, %v638, %v644
    %vm646 = vcmp.eq.s32.totalorder %v641, 2
    %v647 = vxor.u32 %v638, 2147483648
    %v648 = vsel %vm646, %v647, %v639
    %v649 = vsel %vm642, %v645, %v648
    %v650 = vsel %vm640, nan, %v649
    %v651 = vand.u32 2147483647, %v129
    %vm652 = vcmp.le.f32.partialorder %v651, 0.7853982
    %vm653 = vcmp.lt.s32.totalorder %v129, 0
    %v654 = vand.u32 %v129, 2139095040
    %v655 = vshrl.u32 %v654, 23
    %v656 = vsub.s32 %v655, 127
    %v657 = vand.u32 2147483647, %v129
    %v658 = vand.u32 %v657, 8388607
    %v659 = vor.u32 %v658, 8388608
    %v660 = vsub.s32 0, %v659
    %v661 = vadd.s32 %v656, 1
    %vm662 = vcmp.gt.s32.totalorder %v661, 0
    %v663 = vsel %vm662, %v661, 0
    %v664 = vshrl.u32 %v663, 5
    %v665 = vand.u32 %v663, 31
    %v666 = vsub.s32 32, %v665
    %v667 = vshrl.u32 683565275, %v666
    %v668 = vshll.u32 683565275, %v665
    %v669 = vshrl.u32 2475754826, %v666
    %v670 = vor.u32 %v668, %v669
    %v671 = vshll.u32 2475754826, %v665
    %v672 = vshrl.u32 2131351028, %v666
    %v673 = vor.u32 %v671, %v672
    %v674 = vshll.u32 2131351028, %v665
    %v675 = vshrl.u32 2102212464, %v666
    %v676 = vor.u32 %v674, %v675
    %v677 = vshll.u32 2102212464, %v665
    %v678 = vshrl.u32 920167782, %v666
    %v679 = vor.u32 %v677, %v678
    %v680 = vshll.u32 920167782, %v665
    %v681 = vshrl.u32 1326507024, %v666
    %v682 = vor.u32 %v680, %v681
    %vm683 = vcmp.lt.s32.totalorder %v664, 1
    %vm684 = vcmp.lt.s32.totalorder %v664, 2
    %vm685 = vcmp.lt.s32.totalorder %v664, 3
    %vm686 = vcmp.lt.s32.totalorder %v664, 4
    %v687 = vsel %vm683, %v667, %v670
    %v688 = vsel %vm686, %v676, 2102212464
    %v689 = vsel %vm685, %v673, %v688
    %v690 = vsel %vm684, %v687, %v689
    %v691 = vsel %vm683, %v670, %v673
    %v692 = vsel %vm686, %v679, 920167782
    %v693 = vsel %vm685, %v676, %v692
    %v694 = vsel %vm684, %v691, %v693
    %v695 = vsel %vm683, %v673, %v676
    %v696 = vsel %vm686, %v682, 1326507024
    %v697 = vsel %vm685, %v679, %v696
    %v698 = vsel %vm684, %v695, %v697
    %v699 = vshll.u32 %v659, 8
    %v700 = vmul.u32.u64.compose %v699, %v698
    %v701 = vextract.low.u32 %v700
    %v702 = vextract.high.u32 %v700
    %v703 = vmul.u32.u64.compose %v699, %v694
    %v704 = vextract.low.u32 %v703
    %v705 = vextract.high.u32 %v703
    %v706 = vmul.u32 %v699, %v690
    %v707 = vadd.s32 %v702, %v704
    %vm708 = vc.u32 %v702, %v704
    %v709 = vadd.s32 %v705, 1
    %v710 = vsel %vm708, %v709, %v705
    %v711 = vadd.s32 %v706, %v710
    %v712 = vadd.s32 %v711, 536870912
    %v713 = vshrl.u32 %v712, 30
    %v714 = vshll.u32 %v713, 30
    %v715 = vsub.s32 %v711, %v714
    %vm716 = vcmp.lt.s32.totalorder %v715, 0
    %v717 = vsub.s32 0, %v715
    %v718 = vsel %vm716, %v717, %v715
    %v719 = vclz %v718
    %v720 = vsub.s32 %v719, 2
    %vm721 = vcmp.gt.s32.totalorder 0, %v720
    %v722 = vsel %vm721, 0, %v720
    %v723 = vsub.s32 32, %v722
    %v724 = vshll.u32 %v715, %v722
    %v725 = vshrl.u32 %v707, %v723
    %v726 = vor.u32 %v724, %v725
    %v727 = vsub.s32 4294967266, %v722
    %v728 = vadd.s32 %v727, 127
    %v729 = vshll.u32 %v728, 23
    %v730 = vor.u32 4788187, %v729
    %v731 = vand.u32 2147483647, %v730
    %v733 = vcvt.s32.f32 %v726
    %v734 = vmul.f32 %v733, %v731
    %v735 = vxor.u32 %v734, 2147483648
    %v736 = vsel %vm653, %v735, %v734
    %v737 = vsub.s32 4, %v713
    %v738 = vsel %vm653, %v737, %v713
    %v739 = vsel %vm652, %v129, %v736
    %v740 = vsel %vm652, 0, %v738
    %v741 = vcosq.f32.pop %v739
    %v742 = vsinq.f32.pop %v739
    %vm743 = vweird.f32 %v129
    %v744 = vand.u32 %v740, 3
    %vm745 = vcmp.lt.s32.totalorder %v744, 2
    %vm746 = vcmp.eq.s32.totalorder %v744, 0
    %v747 = vxor.u32 %v742, 2147483648
    %v748 = vsel %vm746, %v741, %v747
    %vm749 = vcmp.eq.s32.totalorder %v744, 2
    %v750 = vxor.u32 %v741, 2147483648
    %v751 = vsel %vm749, %v750, %v742
    %v752 = vsel %vm745, %v748, %v751
    %v753 = vsel %vm743, nan, %v752
    %v754 = vand.u32 2147483647, %v130
    %vm755 = vcmp.le.f32.partialorder %v754, 0.7853982
    %vm756 = vcmp.lt.s32.totalorder %v130, 0
    %v757 = vand.u32 %v130, 2139095040
    %v758 = vshrl.u32 %v757, 23
    %v759 = vsub.s32 %v758, 127
    %v760 = vand.u32 2147483647, %v130
    %v761 = vand.u32 %v760, 8388607
    %v762 = vor.u32 %v761, 8388608
    %v763 = vsub.s32 0, %v762
    %v764 = vadd.s32 %v759, 1
    %vm765 = vcmp.gt.s32.totalorder %v764, 0
    %v766 = vsel %vm765, %v764, 0
    %v767 = vshrl.u32 %v766, 5
    %v768 = vand.u32 %v766, 31
    %v769 = vsub.s32 32, %v768
    %v770 = vshrl.u32 683565275, %v769
    %v771 = vshll.u32 683565275, %v768
    %v772 = vshrl.u32 2475754826, %v769
    %v773 = vor.u32 %v771, %v772
    %v774 = vshll.u32 2475754826, %v768
    %v775 = vshrl.u32 2131351028, %v769
    %v776 = vor.u32 %v774, %v775
    %v777 = vshll.u32 2131351028, %v768
    %v778 = vshrl.u32 2102212464, %v769
    %v779 = vor.u32 %v777, %v778
    %v780 = vshll.u32 2102212464, %v768
    %v781 = vshrl.u32 920167782, %v769
    %v782 = vor.u32 %v780, %v781
    %v783 = vshll.u32 920167782, %v768
    %v784 = vshrl.u32 1326507024, %v769
    %v785 = vor.u32 %v783, %v784
    %vm786 = vcmp.lt.s32.totalorder %v767, 1
    %vm787 = vcmp.lt.s32.totalorder %v767, 2
    %vm788 = vcmp.lt.s32.totalorder %v767, 3
    %vm789 = vcmp.lt.s32.totalorder %v767, 4
    %v790 = vsel %vm786, %v770, %v773
    %v791 = vsel %vm789, %v779, 2102212464
    %v792 = vsel %vm788, %v776, %v791
    %v793 = vsel %vm787, %v790, %v792
    %v794 = vsel %vm786, %v773, %v776
    %v795 = vsel %vm789, %v782, 920167782
    %v796 = vsel %vm788, %v779, %v795
    %v797 = vsel %vm787, %v794, %v796
    %v798 = vsel %vm786, %v776, %v779
    %v799 = vsel %vm789, %v785, 1326507024
    %v800 = vsel %vm788, %v782, %v799
    %v801 = vsel %vm787, %v798, %v800
    %v802 = vshll.u32 %v762, 8
    %v803 = vmul.u32.u64.compose %v802, %v801
    %v804 = vextract.low.u32 %v803
    %v805 = vextract.high.u32 %v803
    %v806 = vmul.u32.u64.compose %v802, %v797
    %v807 = vextract.low.u32 %v806
    %v808 = vextract.high.u32 %v806
    %v809 = vmul.u32 %v802, %v793
    %v810 = vadd.s32 %v805, %v807
    %vm811 = vc.u32 %v805, %v807
    %v812 = vadd.s32 %v808, 1
    %v813 = vsel %vm811, %v812, %v808
    %v814 = vadd.s32 %v809, %v813
    %v815 = vadd.s32 %v814, 536870912
    %v816 = vshrl.u32 %v815, 30
    %v817 = vshll.u32 %v816, 30
    %v818 = vsub.s32 %v814, %v817
    %vm819 = vcmp.lt.s32.totalorder %v818, 0
    %v820 = vsub.s32 0, %v818
    %v821 = vsel %vm819, %v820, %v818
    %v822 = vclz %v821
    %v823 = vsub.s32 %v822, 2
    %vm824 = vcmp.gt.s32.totalorder 0, %v823
    %v825 = vsel %vm824, 0, %v823
    %v826 = vsub.s32 32, %v825
    %v827 = vshll.u32 %v818, %v825
    %v828 = vshrl.u32 %v810, %v826
    %v829 = vor.u32 %v827, %v828
    %v830 = vsub.s32 4294967266, %v825
    %v831 = vadd.s32 %v830, 127
    %v832 = vshll.u32 %v831, 23
    %v833 = vor.u32 4788187, %v832
    %v834 = vand.u32 2147483647, %v833
    %v836 = vcvt.s32.f32 %v829
    %v837 = vmul.f32 %v836, %v834
    %v838 = vxor.u32 %v837, 2147483648
    %v839 = vsel %vm756, %v838, %v837
    %v840 = vsub.s32 4, %v816
    %v841 = vsel %vm756, %v840, %v816
    %v842 = vsel %vm755, %v130, %v839
    %v843 = vsel %vm755, 0, %v841
    %v844 = vcosq.f32.pop %v842
    %v845 = vsinq.f32.pop %v842
    %vm846 = vweird.f32 %v130
    %v847 = vand.u32 %v843, 3
    %vm848 = vcmp.lt.s32.totalorder %v847, 2
    %vm849 = vcmp.eq.s32.totalorder %v847, 0
    %v850 = vxor.u32 %v845, 2147483648
    %v851 = vsel %vm849, %v844, %v850
    %vm852 = vcmp.eq.s32.totalorder %v847, 2
    %v853 = vxor.u32 %v844, 2147483648
    %v854 = vsel %vm852, %v853, %v845
    %v855 = vsel %vm848, %v851, %v854
    %v856 = vsel %vm846, nan, %v855
    %v857 = vand.u32 2147483647, %v131
    %vm858 = vcmp.le.f32.partialorder %v857, 0.7853982
    %vm859 = vcmp.lt.s32.totalorder %v131, 0
    %v860 = vand.u32 %v131, 2139095040
    %v861 = vshrl.u32 %v860, 23
    %v862 = vsub.s32 %v861, 127
    %v863 = vand.u32 2147483647, %v131
    %v864 = vand.u32 %v863, 8388607
    %v865 = vor.u32 %v864, 8388608
    %v866 = vsub.s32 0, %v865
    %v867 = vadd.s32 %v862, 1
    %vm868 = vcmp.gt.s32.totalorder %v867, 0
    %v869 = vsel %vm868, %v867, 0
    %v870 = vshrl.u32 %v869, 5
    %v871 = vand.u32 %v869, 31
    %v872 = vsub.s32 32, %v871
    %v873 = vshrl.u32 683565275, %v872
    %v874 = vshll.u32 683565275, %v871
    %v875 = vshrl.u32 2475754826, %v872
    %v876 = vor.u32 %v874, %v875
    %v877 = vshll.u32 2475754826, %v871
    %v878 = vshrl.u32 2131351028, %v872
    %v879 = vor.u32 %v877, %v878
    %v880 = vshll.u32 2131351028, %v871
    %v881 = vshrl.u32 2102212464, %v872
    %v882 = vor.u32 %v880, %v881
    %v883 = vshll.u32 2102212464, %v871
    %v884 = vshrl.u32 920167782, %v872
    %v885 = vor.u32 %v883, %v884
    %v886 = vshll.u32 920167782, %v871
    %v887 = vshrl.u32 1326507024, %v872
    %v888 = vor.u32 %v886, %v887
    %vm889 = vcmp.lt.s32.totalorder %v870, 1
    %vm890 = vcmp.lt.s32.totalorder %v870, 2
    %vm891 = vcmp.lt.s32.totalorder %v870, 3
    %vm892 = vcmp.lt.s32.totalorder %v870, 4
    %v893 = vsel %vm889, %v873, %v876
    %v894 = vsel %vm892, %v882, 2102212464
    %v895 = vsel %vm891, %v879, %v894
    %v896 = vsel %vm890, %v893, %v895
    %v897 = vsel %vm889, %v876, %v879
    %v898 = vsel %vm892, %v885, 920167782
    %v899 = vsel %vm891, %v882, %v898
    %v900 = vsel %vm890, %v897, %v899
    %v901 = vsel %vm889, %v879, %v882
    %v902 = vsel %vm892, %v888, 1326507024
    %v903 = vsel %vm891, %v885, %v902
    %v904 = vsel %vm890, %v901, %v903
    %v905 = vshll.u32 %v865, 8
    %v906 = vmul.u32.u64.compose %v905, %v904
    %v907 = vextract.low.u32 %v906
    %v908 = vextract.high.u32 %v906
    %v909 = vmul.u32.u64.compose %v905, %v900
    %v910 = vextract.low.u32 %v909
    %v911 = vextract.high.u32 %v909
    %v912 = vmul.u32 %v905, %v896
    %v913 = vadd.s32 %v908, %v910
    %vm914 = vc.u32 %v908, %v910
    %v915 = vadd.s32 %v911, 1
    %v916 = vsel %vm914, %v915, %v911
    %v917 = vadd.s32 %v912, %v916
    %v918 = vadd.s32 %v917, 536870912
    %v919 = vshrl.u32 %v918, 30
    %v920 = vshll.u32 %v919, 30
    %v921 = vsub.s32 %v917, %v920
    %vm922 = vcmp.lt.s32.totalorder %v921, 0
    %v923 = vsub.s32 0, %v921
    %v924 = vsel %vm922, %v923, %v921
    %v925 = vclz %v924
    %v926 = vsub.s32 %v925, 2
    %vm927 = vcmp.gt.s32.totalorder 0, %v926
    %v928 = vsel %vm927, 0, %v926
    %v929 = vsub.s32 32, %v928
    %v930 = vshll.u32 %v921, %v928
    %v931 = vshrl.u32 %v913, %v929
    %v932 = vor.u32 %v930, %v931
    %v933 = vsub.s32 4294967266, %v928
    %v934 = vadd.s32 %v933, 127
    %v935 = vshll.u32 %v934, 23
    %v936 = vor.u32 4788187, %v935
    %v937 = vand.u32 2147483647, %v936
    %v939 = vcvt.s32.f32 %v932
    %v940 = vmul.f32 %v939, %v937
    %v941 = vxor.u32 %v940, 2147483648
    %v942 = vsel %vm859, %v941, %v940
    %v943 = vsub.s32 4, %v919
    %v944 = vsel %vm859, %v943, %v919
    %v945 = vsel %vm858, %v131, %v942
    %v946 = vsel %vm858, 0, %v944
    %v947 = vcosq.f32.pop %v945
    %v948 = vsinq.f32.pop %v945
    %vm949 = vweird.f32 %v131
    %v950 = vand.u32 %v946, 3
    %vm951 = vcmp.lt.s32.totalorder %v950, 2
    %vm952 = vcmp.eq.s32.totalorder %v950, 0
    %v953 = vxor.u32 %v948, 2147483648
    %v954 = vsel %vm952, %v947, %v953
    %vm955 = vcmp.eq.s32.totalorder %v950, 2
    %v956 = vxor.u32 %v947, 2147483648
    %v957 = vsel %vm955, %v956, %v948
    %v958 = vsel %vm951, %v954, %v957
    %v959 = vsel %vm949, nan, %v958
    %v960 = vld [vmem:[%s2] sm:$0xff]
    %v961 = vld [vmem:[%s2 + $0x8] sm:$0xff]
    %v962 = vld [vmem:[%s2 + $0x10] sm:$0xff]
    %v963 = vld [vmem:[%s2 + $0x18] sm:$0xff]
    %968 = vrot.lane.b32.xlu0 %v235, 3
    %v969 = vpop.permute.xlu0 %968
    %970 = vrot.lane.b32.xlu0 %v339, 3
    %v971 = vpop.permute.xlu0 %970
    %972 = vrot.lane.b32.xlu0 %v443, 3
    %v973 = vpop.permute.xlu0 %972
    %974 = vrot.lane.b32.xlu0 %v547, 3
    %v975 = vpop.permute.xlu0 %974
    %984 = vrot.lane.b32.xlu0 %v650, 21
    %v985 = vpop.permute.xlu0 %984
    %986 = vrot.lane.b32.xlu0 %v753, 21
    %v987 = vpop.permute.xlu0 %986
    %988 = vrot.lane.b32.xlu0 %v856, 21
    %v989 = vpop.permute.xlu0 %988
    %990 = vrot.lane.b32.xlu0 %v959, 21
    %v991 = vpop.permute.xlu0 %990
    %1000 = vrot.lane.b32.xlu0 %v960, 39
    %v1001 = vpop.permute.xlu0 %1000
    %1002 = vrot.lane.b32.xlu0 %v961, 39
    %v1003 = vpop.permute.xlu0 %1002
    %1004 = vrot.lane.b32.xlu0 %v962, 39
    %v1005 = vpop.permute.xlu0 %1004
    %1006 = vrot.lane.b32.xlu0 %v963, 39
    %v1007 = vpop.permute.xlu0 %1006
    %vm1012 = vcmask 23552
    %v1013 = vsel %vm1012, %v16, %v969
    %v1014 = vsel %vm1012, %v17, %v971
    %v1015 = vsel %vm1012, %v18, %v973
    %v1016 = vsel %vm1012, %v19, %v975
    %vm1017 = vcmask 171008
    %v1018 = vsel %vm1017, %v1013, %v985
    %v1019 = vsel %vm1017, %v1014, %v987
    %v1020 = vsel %vm1017, %v1015, %v989
    %v1021 = vsel %vm1017, %v1016, %v991
    %vm1022 = vcmask 318464
    %v1023 = vsel %vm1022, %v1018, %v1001
    %v1024 = vsel %vm1022, %v1019, %v1003
    %v1025 = vsel %vm1022, %v1020, %v1005
    %v1026 = vsel %vm1022, %v1021, %v1007
    %vm1027 = vcmask 351232
    %1028 = vst.msk [vmem:[#allocation2] sm:$0xff] %vm1027, %v1023
    %1029 = vst.msk [vmem:[#allocation2 + $0x8] sm:$0xff] %vm1027, %v1024
    %1030 = vst.msk [vmem:[#allocation2 + $0x10] sm:$0xff] %vm1027, %v1025
    %1031 = vst.msk [vmem:[#allocation2 + $0x18] sm:$0xff] %vm1027, %v1026
    // Predicated region
    $region14: #{tpu_custom_call.1} parent=1 // pred_check
      _
    $region15: #{tpu_custom_call.1} parent=1 // pred_check_branch
      %1033 = sbr.rel (0) target = $region17
    $region16: #{tpu_custom_call.1} parent=1 // pred_region
      %s1035 = ssub.s32 512, 512
      %1036 = vsyncadd [#allocation3], %s1035
      %s1037 = sshll.u32 [#allocation2], 4
      %s1038 = int_to_ptr.vmem [resolvable:$true] %s1037
      %1043 = dma.vmem_to_hbm [thread:$0]  %s1038, 512, %s3, [#allocation3], 128, 128, 8
    $region17: #{tpu_custom_call.1} parent=1 // pred_fallthru
      _
    // Predicated region
    $region18: #{tpu_custom_call.1} parent=1 // pred_check
      _
    $region19: #{tpu_custom_call.1} parent=1 // pred_check_branch
      %1045 = sbr.rel (0) target = $region21
    $region20: #{tpu_custom_call.1} parent=1 // pred_region
      %1046 = dma.done [#allocation3], 512
    $region21: #{tpu_custom_call.1} parent=1 // pred_fallthru
      _
    %1047 = vsyncpa [#allocation3], 1

</llo_original>
